<compile_context>
chip_gen: v7x
topology: tpu7x:2x2x1
jax: 0.10.0
libtpu: 0.0.40
codegen_flags: <defaults>
</compile_context>

<pallas_src>
import math

import jax
import jax.numpy as jnp
from jax.experimental import pallas as pl
from jax.experimental.pallas import tpu as pltpu


_MAX_UNROLL = 64  # static unrolled tile-copies per block before using pl.loop


def _tile_rows_kernel(x_ref, o_ref):
    # x_ref: (T, f_blk) input chunk, VMEM-resident across the row-block axis.
    # o_ref: (rows_blk, f_blk) output block.  rows_blk is either a multiple of
    #        T (full tiles only) or the full `timesteps` extent (ragged tail).
    T, _ = x_ref.shape
    rows = o_ref.shape[0]
    nfull = rows // T
    rem = rows - nfull * T
    x = x_ref[...]
    if nfull <= _MAX_UNROLL:
        for i in range(nfull):                      # static unroll
            o_ref[i * T:(i + 1) * T, :] = x
    else:
        @pl.loop(0, nfull)
        def _(i):
            o_ref[pl.ds(i * T, T), :] = x
    if rem > 0:                                     # partial tail tile
        o_ref[nfull * T:nfull * T + rem, :] = x_ref[0:rem, :]


def standardize_timesteps(x: jax.Array, timesteps: int) -> jax.Array:
    """out[t] = x[t % T] for t in range(timesteps); trailing dims untouched."""
    T = x.shape[0]
    trailing = x.shape[1:]
    F = int(math.prod(trailing)) if trailing else 1
    repeat = -(-timesteps // T)          # integer ceiling
    itemsize = jnp.dtype(x.dtype).itemsize

    if repeat < 2:
        # No duplication needed: XLA's native slice beats any kernel launch.
        return x[:timesteps]

    x2 = x.reshape((T, F))

    # ---- generation-aware block budget ------------------------------------
    try:
        vmem_cap = int(pltpu.get_tpu_info().vmem_capacity_bytes)
    except Exception:  # defensive: fall back to the smallest (v7x) budget
        vmem_cap = 64 << 20
    target = min(16 << 20, vmem_cap // 8)  # ~16 MiB v5e/v6e, ~8 MiB v7x

    # ---- feature (lane) chunking -------------------------------------------
    row_unit = math.lcm(T, 8)              # smallest sublane-dense row tile
    rows_hint = min(timesteps, row_unit)
    if F * rows_hint * itemsize <= target or F < 128:
        # Whole-F block (lane-dense when F % 128 == 0; tiny otherwise).
        # TODO(synk): also chunk the time axis for extreme T with tiny F.
        f_blk = F
    else:
        # 128-multiple chunk; ragged last chunk is clipped by Pallas, so F
        # need not be divisible by f_blk (or even by 128).
        f_blk = (target // (rows_hint * itemsize)) // 128 * 128
        f_blk = max(128, min(f_blk, (F // 128) * 128))

    # ---- row (sublane) blocking --------------------------------------------
    if timesteps * f_blk * itemsize <= target:
        rows_blk = timesteps                # full extent: always legal
    else:
        # Multiple of lcm(T, 8): sublane-dense AND every block starts at a
        # multiple of T, so each block is a clean tiling of x.
        k = max(1, target // (row_unit * f_blk * itemsize))
        rows_blk = min(int(k) * row_unit, timesteps)

    n_chunks = pl.cdiv(F, f_blk)
    n_rsteps = pl.cdiv(timesteps, rows_blk)

    # v7x: guarantee >= 2 steps along a "parallel" axis when the data allows,
    # so the second TensorCore isn't idle (no-op on v5e/v6e).
    if n_chunks * n_rsteps == 1 and f_blk % 256 == 0:
        f_blk //= 2
        n_chunks = 2

    in_bytes = T * f_blk * itemsize
    out_bytes = rows_blk * f_blk * itemsize
    # 2x double-buffered in + 2x double-buffered out + headroom, never above
    # physical VMEM (64 MiB on v7x, 128 MiB on v5e/v6e).
    vmem_limit = int(min(max(2 * in_bytes + 2 * out_bytes + (4 << 20), 32 << 20),
                         vmem_cap))

    out2 = pl.pallas_call(
        _tile_rows_kernel,
        out_shape=jax.ShapeDtypeStruct((timesteps, F), x.dtype),
        grid_spec=pl.GridSpec(
            # Chunk axis outermost, row axis innermost: the input block index
            # depends only on the chunk, so each x chunk is DMA'd from HBM
            # once and reused (VMEM-resident) for every output row block.
            grid=(n_chunks, n_rsteps),
            in_specs=[pl.BlockSpec((T, f_blk), lambda c, r: (0, c))],
            out_specs=pl.BlockSpec((rows_blk, f_blk), lambda c, r: (r, c)),
        ),
        compiler_params=pltpu.CompilerParams(
            dimension_semantics=("parallel", "parallel"),
            vmem_limit_bytes=vmem_limit,
        ),
        cost_estimate=pl.CostEstimate(
            flops=0,
            transcendentals=0,
            bytes_accessed=(T * F + timesteps * F) * itemsize,
        ),
    )(x2)

    return out2.reshape((timesteps,) + trailing)


def _reference(x: jax.Array, timesteps: int) -> jax.Array:
    T = x.shape[0]
    repeat = -(-timesteps // T)
    if repeat >= 2:
        x = jnp.tile(x, (repeat,) + (1,) * (x.ndim - 1))
    return x[:timesteps]


if __name__ == "__main__":
    key = jax.random.PRNGKey(0)

    # Primary demo: T=3 input frames tiled up to timesteps=8, CHW frames.
    T, C, H, W = 3, 4, 16, 16
    timesteps = 8  # StandardizeTimesteps(timesteps=8)

    x = jax.random.normal(key, (T, C, H, W), dtype=jnp.float32)
    out = jax.block_until_ready(standardize_timesteps(x, timesteps))
    ref = _reference(x, timesteps)
    assert out.shape == (timesteps, C, H, W), out.shape
    assert out.dtype == x.dtype, out.dtype
    assert jnp.array_equal(out, ref), "mismatch vs reference (main path)"

    # Exact-multiple repeat path (T=4 -> repeat=2).
    x_e = jax.random.normal(jax.random.PRNGKey(1), (4, C, H, W), jnp.float32)
    out_e = jax.block_until_ready(standardize_timesteps(x_e, timesteps))
    assert jnp.array_equal(out_e, _reference(x_e, timesteps)), "mismatch (exact-multiple)"

    # Trailing size not a multiple of 128 (F=35) still correct.
    x_o = jax.random.normal(jax.random.PRNGKey(2), (3, 5, 7), jnp.float32)
    out_o = jax.block_until_ready(standardize_timesteps(x_o, timesteps))
    assert jnp.array_equal(out_o, _reference(x_o, timesteps)), "mismatch (odd F)"

    # Slice-only path (T >= timesteps): handled without a kernel launch.
    x_s = jax.random.normal(jax.random.PRNGKey(3), (10, C, H, W), jnp.float32)
    out_s = jax.block_until_ready(standardize_timesteps(x_s, timesteps))
    assert jnp.array_equal(out_s, _reference(x_s, timesteps)), "mismatch (slice-only)"

    print("KERNEL_OK")
</pallas_src>

<mosaic_0001>
module attributes {stable_mosaic.version = 11 : i64} {
  func.func @_tile_rows_kernel(%arg0: i32, %arg1: i32, %arg2: memref<3x512xf32, #tpu.memory_space<vmem>>, %arg3: memref<8x512xf32, #tpu.memory_space<vmem>>) attributes {dimension_semantics = [#tpu.dimension_semantics<parallel>, #tpu.dimension_semantics<parallel>], iteration_bounds = array<i64: 2, 1>, scalar_prefetch = 0 : i64, scratch_operands = 0 : i64, tpu.core_type = #tpu.core_type<tc>, window_params = [{transform_indices = @transform_0, window_bounds = array<i64: 3, 512>}, {transform_indices = @transform_1, window_bounds = array<i64: 8, 512>}]} {
    %c0 = arith.constant 0 : index
    %c0_0 = arith.constant 0 : index
    %0 = vector.load %arg2[%c0, %c0_0] : memref<3x512xf32, #tpu.memory_space<vmem>>, vector<3x512xf32>
    %c0_1 = arith.constant 0 : index
    %c0_2 = arith.constant 0 : index
    %1 = vector.load %arg3[%c0_1, %c0_2] : memref<8x512xf32, #tpu.memory_space<vmem>>, vector<3x512xf32>
    tpu.vector_store %arg3[%c0_1, %c0_2], %0 {strides = array<i32>} : memref<8x512xf32, #tpu.memory_space<vmem>>, vector<3x512xf32>,
    %c3 = arith.constant 3 : index
    %c0_3 = arith.constant 0 : index
    %2 = vector.load %arg3[%c3, %c0_3] : memref<8x512xf32, #tpu.memory_space<vmem>>, vector<3x512xf32>
    tpu.vector_store %arg3[%c3, %c0_3], %0 {strides = array<i32>} : memref<8x512xf32, #tpu.memory_space<vmem>>, vector<3x512xf32>,
    %c0_4 = arith.constant 0 : index
    %c0_5 = arith.constant 0 : index
    %3 = vector.load %arg2[%c0_4, %c0_5] : memref<3x512xf32, #tpu.memory_space<vmem>>, vector<2x512xf32>
    %c6 = arith.constant 6 : index
    %c0_6 = arith.constant 0 : index
    %4 = vector.load %arg3[%c6, %c0_6] : memref<8x512xf32, #tpu.memory_space<vmem>>, vector<2x512xf32>
    tpu.vector_store %arg3[%c6, %c0_6], %3 {strides = array<i32>} : memref<8x512xf32, #tpu.memory_space<vmem>>, vector<2x512xf32>,
    return
  }
  func.func @transform_0(%arg0: i32, %arg1: i32) -> (i32, i32) {
    %c0_i32 = arith.constant 0 : i32
    %c0_i32_0 = arith.constant 0 : i32
    return %c0_i32, %arg0 : i32, i32
  }
  func.func @transform_1(%arg0: i32, %arg1: i32) -> (i32, i32) {
    %c0_i32 = arith.constant 0 : i32
    return %arg1, %arg0 : i32, i32
  }
}

</mosaic_0001>

<llo_original>
// kernel: tpu_custom_call.1
$region0: #{tpu_custom_call.1}
  #allocation0 [shape = 'u32[]', space=smem, size = 0x4, offset = 0x4, fixed_abs, tag = 'smem constant byte address 0x4 - core index']
  #allocation1 [shape = 'u32[144,128]{1,0:T(1,128)}', space=vmem, size = 0x12000, scoped, tag = 'internal scratch']
  %s0 = inlined_call_operand.hbm [shape: f32[3,1024], index: 0, kind: input, shape index: {}]
  %s1 = inlined_call_operand.hbm [shape: f32[8,1024], index: 1, kind: output, shape index: {}]
  %s2 = sld [smem:[#allocation0]]
  $region41: #{tpu_custom_call.1} parent=0
    _
  %s4 = ssub.s32 1, %s2
  %s5 = scalar_select 0, %s4, %s2
  $region1: #{tpu_custom_call.1} parent=0
    #allocation2 [shape = 'u8[16384]{0}', space=vmem, size = 0x4000, scoped, tag = 'input window, operand 0']
    #allocation3 [shape = 's32[2]{0}', space=sflag, size = 0x8, scoped, tag = 'scoped memory for tpu_custom_call.1']
    #allocation4 [shape = 's32[2]{0}', space=sflag, size = 0x8, scoped, tag = 'scoped memory for tpu_custom_call.1']
    #allocation5 [shape = 'u8[32768]{0}', space=vmem, size = 0x8000, scoped, tag = 'output window, operand 0']
    %6 = vsyncpa [#allocation3], 0
    %s7 = scalar_lea.sflag [#allocation3], 1
    %8 = vsyncpa %s7, 0
    %9 = vsyncpa [#allocation4], 0
    %s10 = scalar_lea.sflag [#allocation4], 1
    %11 = vsyncpa %s10, 0
    loop: start=0, step=1, limit=4
    $region2: #{tpu_custom_call.1} parent=1 // loop_pre_header
      _
    $region3: #{tpu_custom_call.1} parent=1 // loop_header
      %s13 = sphi 0, %s17
      %p14 = scmp.ge.s32.totalorder %s13, 4
      %s20 = sphi 0, %s32
      %s21 = sphi 0, %s28
      %s22 = sphi 0, %s20
      %s23 = sphi 0, %s21
      %s24 = sphi 0, %s22
      %s25 = sphi 0, %s23
      %s35 = sphi 0, %s37
      %s38 = sphi 0, %s35
      %s39 = sphi 0, %s38
      %s55 = sphi 0, %s39
      %s63 = sphi 0, %s65
      %s66 = sphi 0, %s63
      %s67 = sphi 0, %s66
      %s83 = sphi 0, %s67
    $region4: #{tpu_custom_call.1} parent=1 // loop_header_branch
      %16 = sbr.rel (%p14) target = $region8
    $region5: #{tpu_custom_call.1} parent=1 // loop_body
      %s18 = ssub.s32 %s13, 1
      %s19 = ssub.s32 %s13, 2
      %s26 = sadd.s32 1, %s21
      %p27 = scmp.ge.s32.totalorder %s26, 1
      %s28 = scalar_select %p27, 0, %s26
      %s29 = sadd.s32 1, %s20
      %s30 = scalar_select %p27, %s29, %s20
      %p31 = scmp.ge.s32.totalorder %s30, 2
      %s32 = scalar_select %p31, 0, %s30
      %s33 = ssub.s32 %s20, %s32
      %p34 = scmp.eq.s32.totalorder %s33, 0
      %s36 = sadd.s32 %s35, 1
      %s37 = scalar_select %p34, %s35, %s36
      %p40 = pneg %p34
      %p41 = scmp.eq.s32.totalorder %s13, 1
      %p42 = por %p40, %p41
      %p43 = scmp.ne.s32.totalorder %s35, %s38
      %p44 = scmp.eq.s32.totalorder %s13, 0
      %p45 = por %p43, %p44
      %p46 = scmp.ne.s32.totalorder %s35, %s38
      %p47 = scmp.eq.s32.totalorder %s18, 1
      %p48 = por %p46, %p47
      %p49 = scmp.ne.s32.totalorder %s38, %s39
      %p50 = scmp.eq.s32.totalorder %s18, 0
      %p51 = por %p49, %p50
      %p52 = scmp.ne.s32.totalorder %s38, %s39
      %p53 = scmp.eq.s32.totalorder %s19, 1
      %p54 = por %p52, %p53
      %p56 = scmp.ne.s32.totalorder %s39, %s55
      %p57 = scmp.eq.s32.totalorder %s19, 0
      %p58 = por %p56, %p57
      %s59 = ssub.s32 %s21, %s28
      %s60 = ssub.s32 %s20, %s32
      %s61 = sor.u32 %s59, %s60
      %p62 = scmp.eq.s32.totalorder %s61, 0
      %s64 = sadd.s32 %s63, 1
      %s65 = scalar_select %p62, %s63, %s64
      %p68 = pneg %p62
      %p69 = scmp.eq.s32.totalorder %s13, 1
      %p70 = por %p68, %p69
      %p71 = scmp.ne.s32.totalorder %s63, %s66
      %p72 = scmp.eq.s32.totalorder %s13, 0
      %p73 = por %p71, %p72
      %p74 = scmp.ne.s32.totalorder %s63, %s66
      %p75 = scmp.eq.s32.totalorder %s18, 1
      %p76 = por %p74, %p75
      %p77 = scmp.ne.s32.totalorder %s66, %s67
      %p78 = scmp.eq.s32.totalorder %s18, 0
      %p79 = por %p77, %p78
      %p80 = scmp.ne.s32.totalorder %s66, %s67
      %p81 = scmp.eq.s32.totalorder %s19, 1
      %p82 = por %p80, %p81
      %p84 = scmp.ne.s32.totalorder %s67, %s83
      %p85 = scmp.eq.s32.totalorder %s19, 0
      %p86 = por %p84, %p85
      %p87 = scmp.le.s32.totalorder 1, %s13
      %p88 = scmp.lt.s32.totalorder %s13, 3
      %p89 = pnand %p87, %p88
      %p90 = pneg %p89
      // Predicated region
      $region9: #{tpu_custom_call.1} parent=5 // pred_check
        _
      $region10: #{tpu_custom_call.1} parent=5 // pred_check_branch
        %92 = sbr.rel (%p89) target = $region12
      $region11: #{tpu_custom_call.1} parent=5 // pred_region
        %s93 = ssub.s32 %s13, 1
      $region12: #{tpu_custom_call.1} parent=5 // pred_fallthru
        _
      %p94 = scmp.lt.s32.totalorder %s13, 2
      // Predicated region
      $region13: #{tpu_custom_call.1} parent=5 // pred_check
        %p95 = pneg %p94
      $region14: #{tpu_custom_call.1} parent=5 // pred_check_branch
        %97 = sbr.rel (%p95) target = $region16
      $region15: #{tpu_custom_call.1} parent=5 // pred_region
        // Predicated region
        $region17: #{tpu_custom_call.1} parent=15 // pred_check
          %p98 = pneg %p45
        $region18: #{tpu_custom_call.1} parent=15 // pred_check_branch
          %100 = sbr.rel (%p98) target = $region20
        $region19: #{tpu_custom_call.1} parent=15 // pred_region
          %s101 = sand.u32 %s35, 1
          %s102 = scalar_lea.sflag [#allocation3], %s101
          %s103 = sand.u32 %s35, 1
          %s104 = smul.addr %s103, 16
          %s105 = scalar_lea.vmem [#allocation2], %s104
          %s106 = smul.u32 4, %s20
          %s108 = ssub.s32 256, 256
          %109 = vsyncadd %s102, %s108
          %s110 = smul.addr %s106, 64
          %s111 = scalar_lea.hbm %s0, %s110
          %s113 = sshll.u32 %s105, 4
          %s114 = int_to_ptr.vmem [resolvable:$true] %s113
          %116 = dma.hbm_to_vmem [thread:$0]  %s111, 256, %s114, %s102
        $region20: #{tpu_custom_call.1} parent=15 // pred_fallthru
          _
      $region16: #{tpu_custom_call.1} parent=5 // pred_fallthru
        _
      %p117 = scmp.le.s32.totalorder 1, %s13
      %p118 = scmp.lt.s32.totalorder %s13, 3
      %p119 = pnand %p117, %p118
      %p120 = pneg %p119
      // Predicated region
      $region21: #{tpu_custom_call.1} parent=5 // pred_check
        _
      $region22: #{tpu_custom_call.1} parent=5 // pred_check_branch
        %122 = sbr.rel (%p119) target = $region24
      $region23: #{tpu_custom_call.1} parent=5 // pred_region
        %s123 = ssub.s32 %s13, 1
        %s124 = sand.u32 %s38, 1
        %s125 = scalar_lea.sflag [#allocation3], %s124
        %s126 = sand.u32 %s38, 1
        %s127 = smul.addr %s126, 16
        %s128 = scalar_lea.vmem [#allocation2], %s127
        // Predicated region
        $region25: #{tpu_custom_call.1} parent=23 // pred_check
          %p129 = pneg %p51
        $region26: #{tpu_custom_call.1} parent=23 // pred_check_branch
          %131 = sbr.rel (%p129) target = $region28
        $region27: #{tpu_custom_call.1} parent=23 // pred_region
          %132 = dma.done %s125, 256
        $region28: #{tpu_custom_call.1} parent=23 // pred_fallthru
          _
        %s133 = sand.u32 %s38, 1
        %s134 = scalar_lea.sflag [#allocation3], %s133
        %s135 = sand.u32 %s38, 1
        %s136 = smul.addr %s135, 16
        %s137 = scalar_lea.vmem [#allocation2], %s136
        %p138 = pneg %p51
        %p139 = pneg %p48
        %p140 = pneg %p79
        %p141 = pneg %p76
        %s142 = sand.u32 %s66, 1
        %s143 = scalar_lea.sflag [#allocation4], %s142
        %s144 = sand.u32 %s66, 1
        %s145 = smul.addr %s144, 32
        %s146 = scalar_lea.vmem [#allocation5], %s145
        %s147 = smul.u32 4, %s22
        %s148 = smul.u32 4, %s22
        %v149 = vld [vmem:[%s128] sm:$0x77]
        %v150 = vld [vmem:[%s128 + $0x8] sm:$0x77]
        %v153 = vcombine.high %v149, %v149
        %v154 = vcombine.high %v150, %v150
        %157 = vst [vmem:[%s146] sm:$0x7] %v149
        %158 = vst [vmem:[%s146 + $0x8] sm:$0x7] %v153
        %159 = vst [vmem:[%s146 + $0x10] sm:$0x7] %v150
        %160 = vst [vmem:[%s146 + $0x18] sm:$0x7] %v154
        %v161 = vrot.slane %v149, 5
        %v162 = vrot.slane %v153, 5
        %v163 = vrot.slane %v150, 5
        %v164 = vrot.slane %v154, 5
        %169 = vst [vmem:[%s146] sm:$0x38] %v161
        %170 = vst [vmem:[%s146 + $0x8] sm:$0x38] %v162
        %171 = vst [vmem:[%s146 + $0x10] sm:$0x38] %v163
        %172 = vst [vmem:[%s146 + $0x18] sm:$0x38] %v164
        %v173 = vld [vmem:[%s128] sm:$0x33]
        %v174 = vld [vmem:[%s128 + $0x8] sm:$0x33]
        %v177 = vcombine.high %v173, %v173
        %v178 = vcombine.high %v174, %v174
        %v179 = vrot.slane %v173, 2
        %v180 = vrot.slane %v177, 2
        %v181 = vrot.slane %v174, 2
        %v182 = vrot.slane %v178, 2
        %187 = vst [vmem:[%s146] sm:$0xc0] %v179
        %188 = vst [vmem:[%s146 + $0x8] sm:$0xc0] %v180
        %189 = vst [vmem:[%s146 + $0x10] sm:$0xc0] %v181
        %190 = vst [vmem:[%s146 + $0x18] sm:$0xc0] %v182
        %s191 = sand.u32 %s66, 1
        %s192 = scalar_lea.sflag [#allocation4], %s191
        %s193 = sand.u32 %s66, 1
        %s194 = smul.addr %s193, 32
        %s195 = scalar_lea.vmem [#allocation5], %s194
        // Predicated region
        $region29: #{tpu_custom_call.1} parent=23 // pred_check
          %p196 = pneg %p76
        $region30: #{tpu_custom_call.1} parent=23 // pred_check_branch
          %198 = sbr.rel (%p196) target = $region32
        $region31: #{tpu_custom_call.1} parent=23 // pred_region
          %s199 = smul.u32 4, %s22
          %s201 = ssub.s32 512, 512
          %202 = vsyncadd %s192, %s201
          %s203 = smul.addr %s23, 8
          %s204 = sadd.s32 %s199, %s203
          %s205 = smul.addr %s204, 128
          %s206 = scalar_lea.hbm %s1, %s205
          %s208 = sshll.u32 %s195, 4
          %s209 = int_to_ptr.vmem [resolvable:$true] %s208
          %211 = dma.vmem_to_hbm [thread:$0]  %s209, 512, %s206, %s192
        $region32: #{tpu_custom_call.1} parent=23 // pred_fallthru
          _
      $region24: #{tpu_custom_call.1} parent=5 // pred_fallthru
        _
      %p212 = scmp.le.s32.totalorder 2, %s13
      // Predicated region
      $region33: #{tpu_custom_call.1} parent=5 // pred_check
        %p213 = pneg %p212
      $region34: #{tpu_custom_call.1} parent=5 // pred_check_branch
        %215 = sbr.rel (%p213) target = $region36
      $region35: #{tpu_custom_call.1} parent=5 // pred_region
        %s216 = ssub.s32 %s13, 2
        // Predicated region
        $region37: #{tpu_custom_call.1} parent=35 // pred_check
          %p217 = pneg %p82
        $region38: #{tpu_custom_call.1} parent=35 // pred_check_branch
          %219 = sbr.rel (%p217) target = $region40
        $region39: #{tpu_custom_call.1} parent=35 // pred_region
          %s220 = sand.u32 %s67, 1
          %s221 = scalar_lea.sflag [#allocation4], %s220
          %s222 = sand.u32 %s67, 1
          %s223 = smul.addr %s222, 32
          %s224 = scalar_lea.vmem [#allocation5], %s223
          %225 = dma.done %s221, 512
        $region40: #{tpu_custom_call.1} parent=35 // pred_fallthru
          _
      $region36: #{tpu_custom_call.1} parent=5 // pred_fallthru
        _
    $region6: #{tpu_custom_call.1} parent=1 // loop_footer
      %s17 = sadd.s32 1, %s13
    $region7: #{tpu_custom_call.1} parent=1 // loop_footer_branch
      %12 = sbr.rel target = $region3
    $region8: #{tpu_custom_call.1} parent=1 // loop_exit
      _
    %226 = vsyncpa [#allocation3], 1
    %s227 = scalar_lea.sflag [#allocation3], 1
    %228 = vsyncpa %s227, 1
    %229 = vsyncpa [#allocation4], 1
    %s230 = scalar_lea.sflag [#allocation4], 1
    %231 = vsyncpa %s230, 1

</llo_original>
